<compile_context>
chip_gen: v5e
topology: v5e:2x2
jax: 0.10.0
libtpu: 0.0.40
codegen_flags: <defaults>
</compile_context>

<pallas_src>
import functools

import jax
import jax.numpy as jnp
from jax import lax
from jax.experimental import pallas as pl
from jax.experimental.pallas import tpu as pltpu


def _round_up(x, m):
    return (x + m - 1) // m * m


def _vmem_capacity_bytes():
    """Physical VMEM of the current TPU generation (conservative fallback)."""
    try:
        info = pltpu.get_tpu_info()
        cap = int(getattr(info, "vmem_capacity_bytes", 0))
        if cap > 0:
            return cap
    except Exception:  # off-TPU / older jax: be conservative (v7x-sized)
        pass
    return 64 << 20


# -----------------------------------------------------------------------------
# Path A: token table resident in VMEM (default whenever it fits the budget).
# -----------------------------------------------------------------------------
def _embed_resident_kernel(ids_ref, pos_ref, tok_ref, out_ref, *, seq_pad, tile):
    # ids_ref : (B * seq_pad,) int32 in SMEM (scalar prefetch)
    # pos_ref : (tile, D)   positional rows for this sequence tile (VMEM)
    # tok_ref : (V, D)      full token table, VMEM resident (constant block)
    # out_ref : (tile, D)   output tile (leading batch dim squeezed)
    si = pl.program_id(0)
    b = pl.program_id(1)
    base = b * seq_pad + si * tile

    def body(r, carry):
        tok_id = ids_ref[base + r]
        row = tok_ref[pl.ds(tok_id, 1), :] + pos_ref[pl.ds(r, 1), :]
        out_ref[pl.ds(r, 1), :] = row.astype(out_ref.dtype)
        return carry

    lax.fori_loop(0, tile, body, 0, unroll=8)


# -----------------------------------------------------------------------------
# Path B: token table stays in HBM; per-row DMA gather straight into out_ref.
# -----------------------------------------------------------------------------
def _embed_hbm_kernel(ids_ref, pos_ref, tok_hbm, out_ref, sems,
                      *, seq_pad, tile, n_sem):
    si = pl.program_id(0)
    b = pl.program_id(1)
    base = b * seq_pad + si * tile
    window = min(n_sem, tile)

    def start_row(r, tok_id):
        pltpu.make_async_copy(
            tok_hbm.at[pl.ds(tok_id, 1), :],
            out_ref.at[pl.ds(r, 1), :],
            sems.at[r % n_sem],
        ).start()

    def wait_row(r):
        # Shape-only descriptor (row 0): .wait() only needs the (1, D)
        # transfer size; both start/wait share this single helper pair so the
        # granularity cannot drift apart.
        pltpu.make_async_copy(
            tok_hbm.at[pl.ds(0, 1), :],
            out_ref.at[pl.ds(r, 1), :],
            sems.at[r % n_sem],
        ).wait()

    # Prime the pipeline with up to `window` outstanding row gathers.
    def prime(r, carry):
        start_row(r, ids_ref[base + r])
        return carry

    lax.fori_loop(0, window, prime, 0, unroll=True)

    # Drain in order, refilling the in-flight window.
    def drain(r, carry):
        nxt = r + window
        # Hoist the SMEM id read of the next row ABOVE the wait: .wait()
        # breaks SMEM sst->sld forwarding, so reading after it stalls.
        nxt_id = ids_ref[base + jnp.minimum(nxt, tile - 1)]
        wait_row(r)  # must stay before re-issuing on the same semaphore slot

        @pl.when(nxt < tile)
        def _():
            start_row(nxt, nxt_id)

        return carry

    lax.fori_loop(0, tile, drain, 0, unroll=8)

    out_ref[...] = (out_ref[...] + pos_ref[...]).astype(out_ref.dtype)


def input_embeddings(input_ids, token_table, pos_table,
                     *, tile_target=512, n_sem=32, residency="auto"):
    """input_ids: (B, S) int; token_table: (V, D); pos_table: (P, D) -> (B, S, D)."""
    B, S = input_ids.shape
    V, D = token_table.shape
    P, Dp = pos_table.shape
    assert D == Dp, "embedding dims of the two tables must match"
    assert S <= P, "sequence length exceeds max_position_embeddings"
    assert token_table.dtype == pos_table.dtype, (
        "token/positional tables must share a dtype (the HBM path DMAs token "
        "rows directly into the output tile)")
    out_dtype = token_table.dtype
    itemsize = jnp.dtype(out_dtype).itemsize

    cap = _vmem_capacity_bytes()
    budget = int(cap * 0.85)

    # Pick a sequence tile (multiple of 8) keeping the double-buffered
    # pos + out tiles well inside the per-generation budget.
    tile = max(8, _round_up(min(S, tile_target), 8))
    while tile > 8 and 4 * tile * D * itemsize > budget // 2:
        tile = max(8, _round_up(tile // 2, 8))

    if tile >= S:
        seq_pad = _round_up(S, 8)
        tile = seq_pad
    else:
        seq_pad = _round_up(S, tile)
    n_tiles = seq_pad // tile

    # Decide whether the token table can live in VMEM (conservatively assume
    # the pipeline double-buffers the constant-index table block).
    table_bytes = V * D * itemsize
    tile_bytes = tile * D * itemsize
    resident_needed = 2 * table_bytes + 4 * tile_bytes + (2 << 20)
    hbm_needed = 4 * tile_bytes + (2 << 20)
    if residency == "auto":
        use_resident = resident_needed <= budget
    else:
        use_resident = residency == "vmem"

    # Clamp ids (PyTorch nn.Embedding raises on OOB ids; clamping avoids OOB
    # gathers) and flatten to 1-D for SMEM scalar prefetch.
    # TODO(synk): for very large B*S, switch ids to a blocked (1, tile) SMEM
    # input instead of whole-array scalar prefetch to bound SMEM usage.
    ids = jnp.clip(input_ids.astype(jnp.int32), 0, V - 1)
    if seq_pad != S:
        ids = jnp.pad(ids, ((0, 0), (0, seq_pad - S)))
    ids_flat = ids.reshape(B * seq_pad)

    # Positional rows for arange(S) are just the first S rows (padded).
    pos_used = pos_table[:S]
    if seq_pad != S:
        pos_used = jnp.pad(pos_used, ((0, seq_pad - S), (0, 0)))

    pos_spec = pl.BlockSpec((tile, D), lambda si, b, ids_pref: (si, 0))
    out_spec = pl.BlockSpec((None, tile, D), lambda si, b, ids_pref: (b, si, 0))

    if use_resident:
        kernel = functools.partial(
            _embed_resident_kernel, seq_pad=seq_pad, tile=tile)
        tok_spec = pl.BlockSpec((V, D), lambda si, b, ids_pref: (0, 0))
        scratch = []
        vmem_needed = resident_needed
    else:
        kernel = functools.partial(
            _embed_hbm_kernel, seq_pad=seq_pad, tile=tile, n_sem=n_sem)
        tok_spec = pl.BlockSpec(memory_space=pl.ANY)
        scratch = [pltpu.SemaphoreType.DMA((n_sem,))]
        vmem_needed = hbm_needed

    grid_spec = pltpu.PrefetchScalarGridSpec(
        num_scalar_prefetch=1,               # flattened ids -> SMEM
        grid=(n_tiles, B),                   # batch innermost: pos tile reused
        in_specs=[pos_spec, tok_spec],
        out_specs=out_spec,
        scratch_shapes=scratch,
    )

    # Megacore: with a single sequence tile, also mark the batch axis parallel
    # so both v7x TensorCores get work (pos refetch cost is negligible).
    batch_sem = "parallel" if n_tiles == 1 else "arbitrary"
    vmem_limit = int(min(max(vmem_needed, 16 << 20), int(cap * 0.9)))

    out = pl.pallas_call(
        kernel,
        out_shape=jax.ShapeDtypeStruct((B, seq_pad, D), out_dtype),
        grid_spec=grid_spec,
        compiler_params=pltpu.CompilerParams(
            dimension_semantics=("parallel", batch_sem),
            vmem_limit_bytes=vmem_limit),
    )(ids_flat, pos_used, token_table)

    return out[:, :S, :] if seq_pad != S else out


if __name__ == "__main__":
    # Small shapes consistent with the module's forward pass.
    vocab_size = 64
    embedding_dim = 128            # lane-dense (multiple of 128)
    max_position_embeddings = 16
    B, S = 2, 8

    key = jax.random.PRNGKey(0)
    k_tok, k_pos, k_ids = jax.random.split(key, 3)

    # Deterministic synthetic "parameters" (nn.Embedding weights ~ N(0, 1)).
    token_table = jax.random.normal(k_tok, (vocab_size, embedding_dim), jnp.float32)
    pos_table = jax.random.normal(
        k_pos, (max_position_embeddings, embedding_dim), jnp.float32)
    input_ids = jax.random.randint(k_ids, (B, S), 0, vocab_size, dtype=jnp.int32)

    # Pure-JAX reference.
    ref = token_table[input_ids] + pos_table[jnp.arange(S)][None, :, :]

    # Default path (tiny table -> VMEM-resident gather).
    out = jax.block_until_ready(input_embeddings(input_ids, token_table, pos_table))
    assert out.shape == (B, S, embedding_dim)
    assert out.dtype == jnp.float32
    assert jnp.allclose(out, ref, atol=1e-6), "mismatch (VMEM-resident path)"

    # Also exercise the HBM-gather fallback (used when the table does not fit
    # the generation's VMEM budget, e.g. very large vocabs on v7x).
    out_hbm = jax.block_until_ready(
        input_embeddings(input_ids, token_table, pos_table, residency="hbm"))
    assert jnp.allclose(out_hbm, ref, atol=1e-6), "mismatch (HBM gather path)"

    print("KERNEL_OK")
</pallas_src>

<mosaic_0001>
module attributes {stable_mosaic.version = 11 : i64} {
  func.func @_embed_resident_kernel(%arg0: i32, %arg1: i32, %arg2: memref<16xi32, #tpu.memory_space<smem>>, %arg3: memref<8x128xf32, #tpu.memory_space<vmem>>, %arg4: memref<64x128xf32, #tpu.memory_space<vmem>>, %arg5: memref<1x8x128xf32, #tpu.memory_space<vmem>>) attributes {dimension_semantics = [#tpu.dimension_semantics<parallel>, #tpu.dimension_semantics<parallel>], iteration_bounds = array<i64: 1, 2>, scalar_prefetch = 1 : i64, scratch_operands = 0 : i64, tpu.core_type = #tpu.core_type<tc>, window_params = [{transform_indices = @transform_0, window_bounds = array<i64: 8, 128>}, {pipeline_mode = #tpu.pipeline_mode<synchronous>, transform_indices = @transform_1, window_bounds = array<i64: 64, 128>}, {transform_indices = @transform_2, window_bounds = array<i64: 1, 8, 128>}]} {
    %c8_i32 = arith.constant 8 : i32
    %0 = arith.muli %arg1, %c8_i32 : i32
    %c8_i32_0 = arith.constant 8 : i32
    %1 = arith.muli %arg0, %c8_i32_0 : i32
    %2 = arith.addi %0, %1 : i32
    %c0_i32 = arith.constant 0 : i32
    %3 = arith.addi %2, %c0_i32 : i32
    %4 = arith.index_cast %3 : i32 to index
    %5 = memref.load %arg2[%4] : memref<16xi32, #tpu.memory_space<smem>>
    %6 = arith.index_cast %5 : i32 to index
    %c0 = arith.constant 0 : index
    %7 = vector.load %arg4[%6, %c0] : memref<64x128xf32, #tpu.memory_space<vmem>>, vector<1x128xf32>
    %8 = arith.index_cast %c0_i32 : i32 to index
    %c0_1 = arith.constant 0 : index
    %9 = vector.load %arg3[%8, %c0_1] : memref<8x128xf32, #tpu.memory_space<vmem>>, vector<1x128xf32>
    %10 = arith.addf %7, %9 : vector<1x128xf32>
    %c0_2 = arith.constant 0 : index
    %11 = arith.index_cast %c0_i32 : i32 to index
    %c0_3 = arith.constant 0 : index
    %12 = vector.load %arg5[%c0_2, %11, %c0_3] : memref<1x8x128xf32, #tpu.memory_space<vmem>>, vector<1x1x128xf32>
    %13 = vector.shape_cast %12 : vector<1x1x128xf32> to vector<1x128xf32>
    %14 = vector.shape_cast %10 : vector<1x128xf32> to vector<1x1x128xf32>
    tpu.vector_store %arg5[%c0_2, %11, %c0_3], %14 {strides = array<i32>} : memref<1x8x128xf32, #tpu.memory_space<vmem>>, vector<1x1x128xf32>,
    %c1_i32 = arith.constant 1 : i32
    %15 = arith.addi %2, %c1_i32 : i32
    %16 = arith.index_cast %15 : i32 to index
    %17 = memref.load %arg2[%16] : memref<16xi32, #tpu.memory_space<smem>>
    %18 = arith.index_cast %17 : i32 to index
    %c0_4 = arith.constant 0 : index
    %19 = vector.load %arg4[%18, %c0_4] : memref<64x128xf32, #tpu.memory_space<vmem>>, vector<1x128xf32>
    %20 = arith.index_cast %c1_i32 : i32 to index
    %c0_5 = arith.constant 0 : index
    %21 = vector.load %arg3[%20, %c0_5] : memref<8x128xf32, #tpu.memory_space<vmem>>, vector<1x128xf32>
    %22 = arith.addf %19, %21 : vector<1x128xf32>
    %c0_6 = arith.constant 0 : index
    %23 = arith.index_cast %c1_i32 : i32 to index
    %c0_7 = arith.constant 0 : index
    %24 = vector.load %arg5[%c0_6, %23, %c0_7] : memref<1x8x128xf32, #tpu.memory_space<vmem>>, vector<1x1x128xf32>
    %25 = vector.shape_cast %24 : vector<1x1x128xf32> to vector<1x128xf32>
    %26 = vector.shape_cast %22 : vector<1x128xf32> to vector<1x1x128xf32>
    tpu.vector_store %arg5[%c0_6, %23, %c0_7], %26 {strides = array<i32>} : memref<1x8x128xf32, #tpu.memory_space<vmem>>, vector<1x1x128xf32>,
    %c2_i32 = arith.constant 2 : i32
    %27 = arith.addi %2, %c2_i32 : i32
    %28 = arith.index_cast %27 : i32 to index
    %29 = memref.load %arg2[%28] : memref<16xi32, #tpu.memory_space<smem>>
    %30 = arith.index_cast %29 : i32 to index
    %c0_8 = arith.constant 0 : index
    %31 = vector.load %arg4[%30, %c0_8] : memref<64x128xf32, #tpu.memory_space<vmem>>, vector<1x128xf32>
    %32 = arith.index_cast %c2_i32 : i32 to index
    %c0_9 = arith.constant 0 : index
    %33 = vector.load %arg3[%32, %c0_9] : memref<8x128xf32, #tpu.memory_space<vmem>>, vector<1x128xf32>
    %34 = arith.addf %31, %33 : vector<1x128xf32>
    %c0_10 = arith.constant 0 : index
    %35 = arith.index_cast %c2_i32 : i32 to index
    %c0_11 = arith.constant 0 : index
    %36 = vector.load %arg5[%c0_10, %35, %c0_11] : memref<1x8x128xf32, #tpu.memory_space<vmem>>, vector<1x1x128xf32>
    %37 = vector.shape_cast %36 : vector<1x1x128xf32> to vector<1x128xf32>
    %38 = vector.shape_cast %34 : vector<1x128xf32> to vector<1x1x128xf32>
    tpu.vector_store %arg5[%c0_10, %35, %c0_11], %38 {strides = array<i32>} : memref<1x8x128xf32, #tpu.memory_space<vmem>>, vector<1x1x128xf32>,
    %c3_i32 = arith.constant 3 : i32
    %39 = arith.addi %2, %c3_i32 : i32
    %40 = arith.index_cast %39 : i32 to index
    %41 = memref.load %arg2[%40] : memref<16xi32, #tpu.memory_space<smem>>
    %42 = arith.index_cast %41 : i32 to index
    %c0_12 = arith.constant 0 : index
    %43 = vector.load %arg4[%42, %c0_12] : memref<64x128xf32, #tpu.memory_space<vmem>>, vector<1x128xf32>
    %44 = arith.index_cast %c3_i32 : i32 to index
    %c0_13 = arith.constant 0 : index
    %45 = vector.load %arg3[%44, %c0_13] : memref<8x128xf32, #tpu.memory_space<vmem>>, vector<1x128xf32>
    %46 = arith.addf %43, %45 : vector<1x128xf32>
    %c0_14 = arith.constant 0 : index
    %47 = arith.index_cast %c3_i32 : i32 to index
    %c0_15 = arith.constant 0 : index
    %48 = vector.load %arg5[%c0_14, %47, %c0_15] : memref<1x8x128xf32, #tpu.memory_space<vmem>>, vector<1x1x128xf32>
    %49 = vector.shape_cast %48 : vector<1x1x128xf32> to vector<1x128xf32>
    %50 = vector.shape_cast %46 : vector<1x128xf32> to vector<1x1x128xf32>
    tpu.vector_store %arg5[%c0_14, %47, %c0_15], %50 {strides = array<i32>} : memref<1x8x128xf32, #tpu.memory_space<vmem>>, vector<1x1x128xf32>,
    %c4_i32 = arith.constant 4 : i32
    %51 = arith.addi %2, %c4_i32 : i32
    %52 = arith.index_cast %51 : i32 to index
    %53 = memref.load %arg2[%52] : memref<16xi32, #tpu.memory_space<smem>>
    %54 = arith.index_cast %53 : i32 to index
    %c0_16 = arith.constant 0 : index
    %55 = vector.load %arg4[%54, %c0_16] : memref<64x128xf32, #tpu.memory_space<vmem>>, vector<1x128xf32>
    %56 = arith.index_cast %c4_i32 : i32 to index
    %c0_17 = arith.constant 0 : index
    %57 = vector.load %arg3[%56, %c0_17] : memref<8x128xf32, #tpu.memory_space<vmem>>, vector<1x128xf32>
    %58 = arith.addf %55, %57 : vector<1x128xf32>
    %c0_18 = arith.constant 0 : index
    %59 = arith.index_cast %c4_i32 : i32 to index
    %c0_19 = arith.constant 0 : index
    %60 = vector.load %arg5[%c0_18, %59, %c0_19] : memref<1x8x128xf32, #tpu.memory_space<vmem>>, vector<1x1x128xf32>
    %61 = vector.shape_cast %60 : vector<1x1x128xf32> to vector<1x128xf32>
    %62 = vector.shape_cast %58 : vector<1x128xf32> to vector<1x1x128xf32>
    tpu.vector_store %arg5[%c0_18, %59, %c0_19], %62 {strides = array<i32>} : memref<1x8x128xf32, #tpu.memory_space<vmem>>, vector<1x1x128xf32>,
    %c5_i32 = arith.constant 5 : i32
    %63 = arith.addi %2, %c5_i32 : i32
    %64 = arith.index_cast %63 : i32 to index
    %65 = memref.load %arg2[%64] : memref<16xi32, #tpu.memory_space<smem>>
    %66 = arith.index_cast %65 : i32 to index
    %c0_20 = arith.constant 0 : index
    %67 = vector.load %arg4[%66, %c0_20] : memref<64x128xf32, #tpu.memory_space<vmem>>, vector<1x128xf32>
    %68 = arith.index_cast %c5_i32 : i32 to index
    %c0_21 = arith.constant 0 : index
    %69 = vector.load %arg3[%68, %c0_21] : memref<8x128xf32, #tpu.memory_space<vmem>>, vector<1x128xf32>
    %70 = arith.addf %67, %69 : vector<1x128xf32>
    %c0_22 = arith.constant 0 : index
    %71 = arith.index_cast %c5_i32 : i32 to index
    %c0_23 = arith.constant 0 : index
    %72 = vector.load %arg5[%c0_22, %71, %c0_23] : memref<1x8x128xf32, #tpu.memory_space<vmem>>, vector<1x1x128xf32>
    %73 = vector.shape_cast %72 : vector<1x1x128xf32> to vector<1x128xf32>
    %74 = vector.shape_cast %70 : vector<1x128xf32> to vector<1x1x128xf32>
    tpu.vector_store %arg5[%c0_22, %71, %c0_23], %74 {strides = array<i32>} : memref<1x8x128xf32, #tpu.memory_space<vmem>>, vector<1x1x128xf32>,
    %c6_i32 = arith.constant 6 : i32
    %75 = arith.addi %2, %c6_i32 : i32
    %76 = arith.index_cast %75 : i32 to index
    %77 = memref.load %arg2[%76] : memref<16xi32, #tpu.memory_space<smem>>
    %78 = arith.index_cast %77 : i32 to index
    %c0_24 = arith.constant 0 : index
    %79 = vector.load %arg4[%78, %c0_24] : memref<64x128xf32, #tpu.memory_space<vmem>>, vector<1x128xf32>
    %80 = arith.index_cast %c6_i32 : i32 to index
    %c0_25 = arith.constant 0 : index
    %81 = vector.load %arg3[%80, %c0_25] : memref<8x128xf32, #tpu.memory_space<vmem>>, vector<1x128xf32>
    %82 = arith.addf %79, %81 : vector<1x128xf32>
    %c0_26 = arith.constant 0 : index
    %83 = arith.index_cast %c6_i32 : i32 to index
    %c0_27 = arith.constant 0 : index
    %84 = vector.load %arg5[%c0_26, %83, %c0_27] : memref<1x8x128xf32, #tpu.memory_space<vmem>>, vector<1x1x128xf32>
    %85 = vector.shape_cast %84 : vector<1x1x128xf32> to vector<1x128xf32>
    %86 = vector.shape_cast %82 : vector<1x128xf32> to vector<1x1x128xf32>
    tpu.vector_store %arg5[%c0_26, %83, %c0_27], %86 {strides = array<i32>} : memref<1x8x128xf32, #tpu.memory_space<vmem>>, vector<1x1x128xf32>,
    %c7_i32 = arith.constant 7 : i32
    %87 = arith.addi %2, %c7_i32 : i32
    %88 = arith.index_cast %87 : i32 to index
    %89 = memref.load %arg2[%88] : memref<16xi32, #tpu.memory_space<smem>>
    %90 = arith.index_cast %89 : i32 to index
    %c0_28 = arith.constant 0 : index
    %91 = vector.load %arg4[%90, %c0_28] : memref<64x128xf32, #tpu.memory_space<vmem>>, vector<1x128xf32>
    %92 = arith.index_cast %c7_i32 : i32 to index
    %c0_29 = arith.constant 0 : index
    %93 = vector.load %arg3[%92, %c0_29] : memref<8x128xf32, #tpu.memory_space<vmem>>, vector<1x128xf32>
    %94 = arith.addf %91, %93 : vector<1x128xf32>
    %c0_30 = arith.constant 0 : index
    %95 = arith.index_cast %c7_i32 : i32 to index
    %c0_31 = arith.constant 0 : index
    %96 = vector.load %arg5[%c0_30, %95, %c0_31] : memref<1x8x128xf32, #tpu.memory_space<vmem>>, vector<1x1x128xf32>
    %97 = vector.shape_cast %96 : vector<1x1x128xf32> to vector<1x128xf32>
    %98 = vector.shape_cast %94 : vector<1x128xf32> to vector<1x1x128xf32>
    tpu.vector_store %arg5[%c0_30, %95, %c0_31], %98 {strides = array<i32>} : memref<1x8x128xf32, #tpu.memory_space<vmem>>, vector<1x1x128xf32>,
    %c8_i32_32 = arith.constant 8 : i32
    return
  }
  func.func @transform_0(%arg0: i32, %arg1: i32, %arg2: memref<16xi32, #tpu.memory_space<smem>>) -> (i32, i32) {
    %c0_i32 = arith.constant 0 : i32
    %c0_i32_0 = arith.constant 0 : i32
    return %arg0, %c0_i32 : i32, i32
  }
  func.func @transform_1(%arg0: i32, %arg1: i32, %arg2: memref<16xi32, #tpu.memory_space<smem>>) -> (i32, i32) {
    %c0_i32 = arith.constant 0 : i32
    %c0_i32_0 = arith.constant 0 : i32
    %c0_i32_1 = arith.constant 0 : i32
    return %c0_i32, %c0_i32_0 : i32, i32
  }
  func.func @transform_2(%arg0: i32, %arg1: i32, %arg2: memref<16xi32, #tpu.memory_space<smem>>) -> (i32, i32, i32) {
    %c0_i32 = arith.constant 0 : i32
    %c0_i32_0 = arith.constant 0 : i32
    return %arg1, %arg0, %c0_i32 : i32, i32, i32
  }
}

</mosaic_0001>

<llo_original>
// kernel: tpu_custom_call.1
$region0: #{tpu_custom_call.1}
  #allocation0 [shape = 'u32[]', space=smem, size = 0x4, offset = 0x4, fixed_abs, tag = 'smem constant byte address 0x4 - core index']
  #allocation1 [shape = 'u32[72,128]{1,0:T(1,128)}', space=vmem, size = 0x9000, scoped, tag = 'internal scratch']
  #allocation2 [shape = 's32[1]{0}', space=sflag, size = 0x4, scoped, tag = 'scoped memory for tpu_custom_call.1']
  #allocation3 [shape = 'u8[512]{0}', space=smem, size = 0x200, scoped, tag = 'prefetched SMEM operand 0']
  %s0 = inlined_call_operand.hbm [shape: s32[16], index: 0, kind: input, shape index: {}]
  %s1 = inlined_call_operand.hbm [shape: f32[8,128], index: 1, kind: input, shape index: {}]
  %s2 = inlined_call_operand.hbm [shape: f32[64,128], index: 2, kind: input, shape index: {}]
  %s3 = inlined_call_operand.hbm [shape: f32[2,8,128], index: 3, kind: output, shape index: {}]
  %s4 = sld [smem:[#allocation0]]
  $region49: #{tpu_custom_call.1} parent=0
    _
  %s6 = ssub.s32 1, %s4
  %s7 = scalar_select 0, %s6, %s4
  %s9 = sshll.u32 %s0, 4
  %s10 = int_to_ptr.hbm [resolvable:$true] %s9
  %12 = dma.hbm_to_smem %s10, 16, [#allocation3], [#allocation2]
  %14 = dma.done [#allocation2], 16
  %15 = sfence
  $region1: #{tpu_custom_call.1} parent=0
    #allocation4 [shape = 'u8[4096]{0}', space=vmem, size = 0x1000, scoped, tag = 'input window, operand 1, single buffered']
    #allocation5 [shape = 's32[2]{0}', space=sflag, size = 0x8, scoped, tag = 'scoped memory for tpu_custom_call.1']
    #allocation6 [shape = 's32[2]{0}', space=sflag, size = 0x8, scoped, tag = 'scoped memory for tpu_custom_call.1']
    #allocation7 [shape = 'u8[32768]{0}', space=vmem, size = 0x8000, scoped, tag = 'input window, operand 2, single buffered']
    #allocation8 [shape = 's32[1]{0}', space=sflag, size = 0x4, scoped, tag = 'scoped memory for tpu_custom_call.1']
    #allocation9 [shape = 'u8[8192]{0}', space=vmem, size = 0x2000, scoped, tag = 'output window, operand 0']
    %16 = vsyncpa [#allocation5], 0
    %17 = vsyncpa [#allocation8], 0
    %18 = vsyncpa [#allocation6], 0
    %s19 = scalar_lea.sflag [#allocation6], 1
    %20 = vsyncpa %s19, 0
    loop: start=0, step=1, limit=4
    $region2: #{tpu_custom_call.1} parent=1 // loop_pre_header
      _
    $region3: #{tpu_custom_call.1} parent=1 // loop_header
      %s22 = sphi 0, %s26
      %p23 = scmp.ge.s32.totalorder %s22, 4
      %s29 = sphi 0, %s41
      %s30 = sphi 0, %s37
      %s31 = sphi 0, %s29
      %s32 = sphi 0, %s30
      %s33 = sphi 0, %s31
      %s34 = sphi 0, %s32
      %s44 = sphi 0, %s46
      %s47 = sphi 0, %s44
      %s48 = sphi 0, %s47
      %s64 = sphi 0, %s48
      %s68 = sphi 0, %s68
      %s70 = sphi 0, %s68
      %s71 = sphi 0, %s70
      %s85 = sphi 0, %s71
      %s93 = sphi 0, %s95
      %s96 = sphi 0, %s93
      %s97 = sphi 0, %s96
      %s113 = sphi 0, %s97
    $region4: #{tpu_custom_call.1} parent=1 // loop_header_branch
      %25 = sbr.rel (%p23) target = $region8
    $region5: #{tpu_custom_call.1} parent=1 // loop_body
      %s27 = ssub.s32 %s22, 1
      %s28 = ssub.s32 %s22, 2
      %s35 = sadd.s32 1, %s30
      %p36 = scmp.ge.s32.totalorder %s35, 2
      %s37 = scalar_select %p36, 0, %s35
      %s38 = sadd.s32 1, %s29
      %s39 = scalar_select %p36, %s38, %s29
      %p40 = scmp.ge.s32.totalorder %s39, 1
      %s41 = scalar_select %p40, 0, %s39
      %s42 = ssub.s32 %s29, %s41
      %p43 = scmp.eq.s32.totalorder %s42, 0
      %s45 = sadd.s32 %s44, 1
      %s46 = scalar_select %p43, %s44, %s45
      %p49 = pneg %p43
      %p50 = scmp.eq.s32.totalorder %s22, 1
      %p51 = por %p49, %p50
      %p52 = scmp.ne.s32.totalorder %s44, %s47
      %p53 = scmp.eq.s32.totalorder %s22, 0
      %p54 = por %p52, %p53
      %p55 = scmp.ne.s32.totalorder %s44, %s47
      %p56 = scmp.eq.s32.totalorder %s27, 1
      %p57 = por %p55, %p56
      %p58 = scmp.ne.s32.totalorder %s47, %s48
      %p59 = scmp.eq.s32.totalorder %s27, 0
      %p60 = por %p58, %p59
      %p61 = scmp.ne.s32.totalorder %s47, %s48
      %p62 = scmp.eq.s32.totalorder %s28, 1
      %p63 = por %p61, %p62
      %p65 = scmp.ne.s32.totalorder %s48, %s64
      %p66 = scmp.eq.s32.totalorder %s28, 0
      %p67 = por %p65, %p66
      %s69 = sadd.s32 %s68, 1
      %p72 = scmp.eq.s32.totalorder %s22, 1
      %p73 = scmp.ne.s32.totalorder %s68, %s70
      %p74 = scmp.eq.s32.totalorder %s22, 0
      %p75 = por %p73, %p74
      %p76 = scmp.ne.s32.totalorder %s68, %s70
      %p77 = scmp.eq.s32.totalorder %s27, 1
      %p78 = por %p76, %p77
      %p79 = scmp.ne.s32.totalorder %s70, %s71
      %p80 = scmp.eq.s32.totalorder %s27, 0
      %p81 = por %p79, %p80
      %p82 = scmp.ne.s32.totalorder %s70, %s71
      %p83 = scmp.eq.s32.totalorder %s28, 1
      %p84 = por %p82, %p83
      %p86 = scmp.ne.s32.totalorder %s71, %s85
      %p87 = scmp.eq.s32.totalorder %s28, 0
      %p88 = por %p86, %p87
      %s89 = ssub.s32 %s30, %s37
      %s90 = ssub.s32 %s29, %s41
      %s91 = sor.u32 %s89, %s90
      %p92 = scmp.eq.s32.totalorder %s91, 0
      %s94 = sadd.s32 %s93, 1
      %s95 = scalar_select %p92, %s93, %s94
      %p98 = pneg %p92
      %p99 = scmp.eq.s32.totalorder %s22, 1
      %p100 = por %p98, %p99
      %p101 = scmp.ne.s32.totalorder %s93, %s96
      %p102 = scmp.eq.s32.totalorder %s22, 0
      %p103 = por %p101, %p102
      %p104 = scmp.ne.s32.totalorder %s93, %s96
      %p105 = scmp.eq.s32.totalorder %s27, 1
      %p106 = por %p104, %p105
      %p107 = scmp.ne.s32.totalorder %s96, %s97
      %p108 = scmp.eq.s32.totalorder %s27, 0
      %p109 = por %p107, %p108
      %p110 = scmp.ne.s32.totalorder %s96, %s97
      %p111 = scmp.eq.s32.totalorder %s28, 1
      %p112 = por %p110, %p111
      %p114 = scmp.ne.s32.totalorder %s97, %s113
      %p115 = scmp.eq.s32.totalorder %s28, 0
      %p116 = por %p114, %p115
      %p117 = scmp.le.s32.totalorder 1, %s22
      %p118 = scmp.lt.s32.totalorder %s22, 3
      %p119 = pnand %p117, %p118
      %p120 = pneg %p119
      // Predicated region
      $region9: #{tpu_custom_call.1} parent=5 // pred_check
        _
      $region10: #{tpu_custom_call.1} parent=5 // pred_check_branch
        %122 = sbr.rel (%p119) target = $region12
      $region11: #{tpu_custom_call.1} parent=5 // pred_region
        %s123 = ssub.s32 %s22, 1
        // Predicated region
        $region13: #{tpu_custom_call.1} parent=11 // pred_check
          %p124 = pneg %p60
        $region14: #{tpu_custom_call.1} parent=11 // pred_check_branch
          %126 = sbr.rel (%p124) target = $region16
        $region15: #{tpu_custom_call.1} parent=11 // pred_region
          %128 = vsyncadd [#allocation5], 0
          %s129 = smul.addr %s31, 8
          %s130 = scalar_lea.hbm %s1, %s129
          %s132 = sshll.u32 %s130, 4
          %s133 = int_to_ptr.hbm [resolvable:$true] %s132
          %s134 = sshll.u32 [#allocation4], 4
          %s135 = int_to_ptr.vmem [resolvable:$true] %s134
          %137 = dma.hbm_to_vmem [thread:$0]  %s133, 128, %s135, [#allocation5]
        $region16: #{tpu_custom_call.1} parent=11 // pred_fallthru
          _
        // Predicated region
        $region17: #{tpu_custom_call.1} parent=11 // pred_check
          %p138 = pneg %p81
        $region18: #{tpu_custom_call.1} parent=11 // pred_check_branch
          %140 = sbr.rel (%p138) target = $region20
        $region19: #{tpu_custom_call.1} parent=11 // pred_region
          %142 = vsyncadd [#allocation8], 0
          %s143 = sshll.u32 %s2, 4
          %s144 = int_to_ptr.hbm [resolvable:$true] %s143
          %s145 = sshll.u32 [#allocation7], 4
          %s146 = int_to_ptr.vmem [resolvable:$true] %s145
          %151 = dma.hbm_to_vmem [thread:$0]  %s144, 1024, %s146, [#allocation8], 128, 128, 8
        $region20: #{tpu_custom_call.1} parent=11 // pred_fallthru
          _
      $region12: #{tpu_custom_call.1} parent=5 // pred_fallthru
        _
      %p152 = scmp.lt.s32.totalorder %s22, 2
      // Predicated region
      $region21: #{tpu_custom_call.1} parent=5 // pred_check
        %p153 = pneg %p152
      $region22: #{tpu_custom_call.1} parent=5 // pred_check_branch
        %155 = sbr.rel (%p153) target = $region24
      $region23: #{tpu_custom_call.1} parent=5 // pred_region
        _
      $region24: #{tpu_custom_call.1} parent=5 // pred_fallthru
        _
      %p156 = scmp.le.s32.totalorder 1, %s22
      %p157 = scmp.lt.s32.totalorder %s22, 3
      %p158 = pnand %p156, %p157
      %p159 = pneg %p158
      // Predicated region
      $region25: #{tpu_custom_call.1} parent=5 // pred_check
        _
      $region26: #{tpu_custom_call.1} parent=5 // pred_check_branch
        %161 = sbr.rel (%p158) target = $region28
      $region27: #{tpu_custom_call.1} parent=5 // pred_region
        %s162 = ssub.s32 %s22, 1
        // Predicated region
        $region29: #{tpu_custom_call.1} parent=27 // pred_check
          %p163 = pneg %p60
        $region30: #{tpu_custom_call.1} parent=27 // pred_check_branch
          %165 = sbr.rel (%p163) target = $region32
        $region31: #{tpu_custom_call.1} parent=27 // pred_region
          %167 = dma.done [#allocation5], 128
        $region32: #{tpu_custom_call.1} parent=27 // pred_fallthru
          _
        // Predicated region
        $region33: #{tpu_custom_call.1} parent=27 // pred_check
          %p168 = pneg %p81
        $region34: #{tpu_custom_call.1} parent=27 // pred_check_branch
          %170 = sbr.rel (%p168) target = $region36
        $region35: #{tpu_custom_call.1} parent=27 // pred_region
          %172 = dma.done [#allocation8], 1024
        $region36: #{tpu_custom_call.1} parent=27 // pred_fallthru
          _
        %p173 = pneg %p60
        %p174 = pneg %p57
        %p175 = pneg %p81
        %p176 = pneg %p78
        %p177 = pneg %p109
        %p178 = pneg %p106
        %s179 = sand.u32 %s96, 1
        %s180 = scalar_lea.sflag [#allocation6], %s179
        %s181 = sand.u32 %s96, 1
        %s182 = smul.addr %s181, 8
        %s183 = scalar_lea.vmem [#allocation9], %s182
        %s184 = smul.u32 %s32, 8
        %s185 = smul.u32 %s31, 8
        %s186 = sadd.s32 %s184, %s185
        %s187 = sld [smem:[#allocation3 + %s186]]
        %s188 = scalar_lea.vmem [#allocation7], %s187
        %v189 = vld [vmem:[%s188] sm:$0x1]
        %v190 = vld [vmem:[#allocation4] sm:$0x1]
        %v191 = vadd.f32 %v189, %v190
        %192 = vst [vmem:[%s183] sm:$0x1] %v191
        %s193 = sadd.s32 %s186, 1
        %s194 = sld [smem:[#allocation3 + %s193]]
        %s195 = scalar_lea.vmem [#allocation7], %s194
        %v196 = vld [vmem:[%s195] sm:$0x1]
        %v197 = vld [vmem:[#allocation4 + $0x1] sm:$0x1]
        %v198 = vadd.f32 %v196, %v197
        %199 = vst [vmem:[%s183 + $0x1] sm:$0x1] %v198
        %s200 = sadd.s32 %s186, 2
        %s201 = sld [smem:[#allocation3 + %s200]]
        %s202 = scalar_lea.vmem [#allocation7], %s201
        %v203 = vld [vmem:[%s202] sm:$0x1]
        %v204 = vld [vmem:[#allocation4 + $0x2] sm:$0x1]
        %v205 = vadd.f32 %v203, %v204
        %206 = vst [vmem:[%s183 + $0x2] sm:$0x1] %v205
        %s207 = sadd.s32 %s186, 3
        %s208 = sld [smem:[#allocation3 + %s207]]
        %s209 = scalar_lea.vmem [#allocation7], %s208
        %v210 = vld [vmem:[%s209] sm:$0x1]
        %v211 = vld [vmem:[#allocation4 + $0x3] sm:$0x1]
        %v212 = vadd.f32 %v210, %v211
        %213 = vst [vmem:[%s183 + $0x3] sm:$0x1] %v212
        %s214 = sadd.s32 %s186, 4
        %s215 = sld [smem:[#allocation3 + %s214]]
        %s216 = scalar_lea.vmem [#allocation7], %s215
        %v217 = vld [vmem:[%s216] sm:$0x1]
        %v218 = vld [vmem:[#allocation4 + $0x4] sm:$0x1]
        %v219 = vadd.f32 %v217, %v218
        %220 = vst [vmem:[%s183 + $0x4] sm:$0x1] %v219
        %s221 = sadd.s32 %s186, 5
        %s222 = sld [smem:[#allocation3 + %s221]]
        %s223 = scalar_lea.vmem [#allocation7], %s222
        %v224 = vld [vmem:[%s223] sm:$0x1]
        %v225 = vld [vmem:[#allocation4 + $0x5] sm:$0x1]
        %v226 = vadd.f32 %v224, %v225
        %227 = vst [vmem:[%s183 + $0x5] sm:$0x1] %v226
        %s228 = sadd.s32 %s186, 6
        %s229 = sld [smem:[#allocation3 + %s228]]
        %s230 = scalar_lea.vmem [#allocation7], %s229
        %v231 = vld [vmem:[%s230] sm:$0x1]
        %v232 = vld [vmem:[#allocation4 + $0x6] sm:$0x1]
        %v233 = vadd.f32 %v231, %v232
        %234 = vst [vmem:[%s183 + $0x6] sm:$0x1] %v233
        %s235 = sadd.s32 %s186, 7
        %s236 = sld [smem:[#allocation3 + %s235]]
        %s237 = scalar_lea.vmem [#allocation7], %s236
        %v238 = vld [vmem:[%s237] sm:$0x1]
        %v239 = vld [vmem:[#allocation4 + $0x7] sm:$0x1]
        %v240 = vadd.f32 %v238, %v239
        %241 = vst [vmem:[%s183 + $0x7] sm:$0x1] %v240
        %s242 = sand.u32 %s96, 1
        %s243 = scalar_lea.sflag [#allocation6], %s242
        %s244 = sand.u32 %s96, 1
        %s245 = smul.addr %s244, 8
        %s246 = scalar_lea.vmem [#allocation9], %s245
        // Predicated region
        $region37: #{tpu_custom_call.1} parent=27 // pred_check
          %p247 = pneg %p106
        $region38: #{tpu_custom_call.1} parent=27 // pred_check_branch
          %249 = sbr.rel (%p247) target = $region40
        $region39: #{tpu_custom_call.1} parent=27 // pred_region
          %251 = vsyncadd %s243, 0
          %s252 = sadd.s32 %s31, %s32
          %s253 = smul.addr %s252, 8
          %s254 = scalar_lea.hbm %s3, %s253
          %s256 = sshll.u32 %s246, 4
          %s257 = int_to_ptr.vmem [resolvable:$true] %s256
          %s258 = sshll.u32 %s254, 4
          %s259 = int_to_ptr.hbm [resolvable:$true] %s258
          %261 = dma.vmem_to_hbm [thread:$0]  %s257, 128, %s259, %s243
        $region40: #{tpu_custom_call.1} parent=27 // pred_fallthru
          _
      $region28: #{tpu_custom_call.1} parent=5 // pred_fallthru
        _
      %p262 = scmp.le.s32.totalorder 2, %s22
      // Predicated region
      $region41: #{tpu_custom_call.1} parent=5 // pred_check
        %p263 = pneg %p262
      $region42: #{tpu_custom_call.1} parent=5 // pred_check_branch
        %265 = sbr.rel (%p263) target = $region44
      $region43: #{tpu_custom_call.1} parent=5 // pred_region
        %s266 = ssub.s32 %s22, 2
        // Predicated region
        $region45: #{tpu_custom_call.1} parent=43 // pred_check
          %p267 = pneg %p112
        $region46: #{tpu_custom_call.1} parent=43 // pred_check_branch
          %269 = sbr.rel (%p267) target = $region48
        $region47: #{tpu_custom_call.1} parent=43 // pred_region
          %s270 = sand.u32 %s97, 1
          %s271 = scalar_lea.sflag [#allocation6], %s270
          %s272 = sand.u32 %s97, 1
          %s273 = smul.addr %s272, 8
          %s274 = scalar_lea.vmem [#allocation9], %s273
          %276 = dma.done %s271, 128
        $region48: #{tpu_custom_call.1} parent=43 // pred_fallthru
          _
      $region44: #{tpu_custom_call.1} parent=5 // pred_fallthru
        _
    $region6: #{tpu_custom_call.1} parent=1 // loop_footer
      %s26 = sadd.s32 1, %s22
    $region7: #{tpu_custom_call.1} parent=1 // loop_footer_branch
      %21 = sbr.rel target = $region3
    $region8: #{tpu_custom_call.1} parent=1 // loop_exit
      _
    %277 = vsyncpa [#allocation5], 1
    %s278 = scalar_lea.sflag [#allocation5], 1
    %279 = vsyncpa %s278, 1
    %280 = vsyncpa [#allocation8], 1
    %281 = vsyncpa [#allocation6], 1
    %s282 = scalar_lea.sflag [#allocation6], 1
    %283 = vsyncpa %s282, 1

</llo_original>
